<compile_context>
chip_gen: v5e
topology: v5e:2x2
jax: 0.10.0
libtpu: 0.0.40
codegen_flags: <defaults>
</compile_context>

<pallas_src>
import functools
import math

import jax
import jax.numpy as jnp
from jax.experimental import pallas as pl
from jax.experimental.pallas import tpu as pltpu

LN_EPS = 1e-5  # torch.nn.LayerNorm default


def _round_up(x, m):
    return (x + m - 1) // m * m


def _conv_ln_kernel(x_main_ref, x_halo_ref, w_ref, p_ref, o_ref, x_scratch, *,
                    tt, subsample, w_context, t_in, d_model, precision):
    """One (batch b, time-tile j) grid step: strided Conv1d + bias + LayerNorm.

    x_main_ref : (tt*subsample, d_input)  raw input rows of this tile
    x_halo_ref : (h_rows, d_input)        first raw rows of the next tile (halo)
    w_ref      : (w_context*d_input, d_model)  flattened conv weight
    p_ref      : (3, d_model)             [conv bias; LN gamma; LN beta]
    o_ref      : (tt, d_model)            output tile
    x_scratch  : (tt*subsample + h_rows, d_input) staging buffer
    """
    j = pl.program_id(1)
    r = tt * subsample                      # raw rows covered by the main block
    h_rows = x_halo_ref.shape[0]
    d_in = x_main_ref.shape[1]
    row0 = j * r

    # Stage main + halo rows into one contiguous scratch, zeroing every row whose
    # absolute time index is >= T.  This implements the module's right-side 'same'
    # zero padding AND kills garbage from partial edge blocks (including the
    # clamped halo block of the last tile, whose intended rows are all >= T).
    main_idx = row0 + jax.lax.broadcasted_iota(jnp.int32, (r, d_in), 0)
    x_scratch[pl.ds(0, r), :] = jnp.where(main_idx < t_in, x_main_ref[...], 0.0)
    halo_idx = (row0 + r) + jax.lax.broadcasted_iota(jnp.int32, (h_rows, d_in), 0)
    x_scratch[pl.ds(r, h_rows), :] = jnp.where(halo_idx < t_in, x_halo_ref[...], 0.0)

    # im2col in VMEM: tap k of output row t is raw row t*subsample + k, i.e. a
    # stride-`subsample` view of the scratch.  Concatenating the w_context taps
    # along K gives a single MXU matmul with K = w_context * d_input.
    pieces = []
    for k in range(w_context):
        if subsample == 1:
            pieces.append(x_scratch[pl.ds(k, tt), :])
        else:
            pieces.append(x_scratch[pl.ds(k, tt, stride=subsample), :])
    xcat = pieces[0] if len(pieces) == 1 else jnp.concatenate(pieces, axis=1)

    y = jnp.dot(xcat, w_ref[...], preferred_element_type=jnp.float32,
                precision=precision)
    y = y + p_ref[pl.ds(0, 1), :]                               # conv bias

    # LayerNorm (biased variance, like torch.nn.LayerNorm).
    inv_d = 1.0 / d_model
    mean = jnp.sum(y, axis=-1, keepdims=True) * inv_d
    centered = y - mean
    var = jnp.sum(centered * centered, axis=-1, keepdims=True) * inv_d
    out = centered * jax.lax.rsqrt(var + LN_EPS)
    out = out * p_ref[pl.ds(1, 1), :] + p_ref[pl.ds(2, 1), :]   # gamma, beta
    o_ref[...] = out.astype(o_ref.dtype)


def conv1d_subsample_forward(feats, feat_lengths, params, *, w_context, subsample,
                             pad="same", time_tile=512, out_dtype=None,
                             precision=jax.lax.Precision.HIGHEST,
                             vmem_budget_bytes=40 * 1024 * 1024):
    """JAX/Pallas equivalent of Conv1dSubsample.forward (pad='same').

    feats        : (B, T, d_input) float32
    feat_lengths : (B,) int32
    params       : conv_w (d_model, d_input, w_context), conv_b (d_model,),
                   ln_g (d_model,), ln_b (d_model,)
    returns (outputs (B, ceil(T/subsample), d_model), output_lengths (B,) int32)
    """
    assert pad == "same", "only the pad='same' path is implemented"
    B, T, d_input = feats.shape
    d_model = params["conv_w"].shape[0]
    s = int(subsample)
    w = int(w_context)
    out_dtype = jnp.dtype(feats.dtype) if out_dtype is None else jnp.dtype(out_dtype)

    t_out = -(-T // s)                               # ceil(T / subsample)
    halo_need = max(w - s, 0)                        # raw rows a tile reads past its block
    h_rows = _round_up(max(halo_need, 1), 8)         # halo block height (multiple of 8)

    # Tile alignment: tt must be a multiple of h_rows (so halo block indices are
    # exact multiples) and of 16 for 16-bit outputs (sublane packing).
    align = h_rows
    if out_dtype.itemsize == 2:
        align = math.lcm(align, 16)
    tt = min(_round_up(t_out, align),
             _round_up(max(int(time_tile), align), align))

    in_bytes = jnp.dtype(feats.dtype).itemsize
    out_bytes = out_dtype.itemsize

    def vmem_estimate(tt_):
        r_ = tt_ * s
        return (2 * r_ * d_input * in_bytes          # main input block (double buffered)
                + 2 * h_rows * d_input * in_bytes    # halo block
                + 2 * w * d_input * d_model * 4      # flattened weight
                + 2 * 8 * d_model * 4                # packed bias/gamma/beta
                + 2 * tt_ * d_model * out_bytes      # output block
                + (r_ + h_rows) * d_input * in_bytes # staging scratch
                + tt_ * w * d_input * 4              # im2col operand
                + 2 * tt_ * d_model * 4)             # matmul / LayerNorm temporaries

    # Shrink the time tile until it fits the (v7x-safe) VMEM budget.
    while vmem_estimate(tt) > vmem_budget_bytes and tt > align:
        tt = max(align, _round_up(tt // 2, align))

    n_tiles = pl.cdiv(t_out, tt)
    r = tt * s
    bpt = r // h_rows                                # halo blocks per time tile
    max_hblk = max((T - 1) // h_rows, 0)             # last (possibly partial) halo block

    # Parameter-sized glue (negligible cost): W[k*d_input + c, o] = conv_w[o, c, k];
    # bias/gamma/beta packed into a single resident operand.
    w_cat = jnp.transpose(params["conv_w"], (2, 1, 0)).reshape(w * d_input, d_model)
    w_cat = w_cat.astype(jnp.float32)
    p_pack = jnp.stack([params["conv_b"], params["ln_g"], params["ln_b"]],
                       axis=0).astype(jnp.float32)

    kernel = functools.partial(
        _conv_ln_kernel, tt=tt, subsample=s, w_context=w, t_in=T,
        d_model=d_model, precision=precision)

    def halo_index_map(b, j):
        # Halo of tile j = first rows of tile j+1.  Clamp the block index so it
        # never points fully past the array; the clamped case only occurs when
        # every intended halo row is >= T, and those are zeroed in-kernel.
        return (b, jnp.minimum((j + 1) * bpt, max_hblk), 0)

    flops = 2 * B * n_tiles * tt * (w * d_input) * d_model
    bytes_accessed = int(B * T * d_input * in_bytes
                         + w * d_input * d_model * 4
                         + B * t_out * d_model * out_bytes)

    out = pl.pallas_call(
        kernel,
        out_shape=jax.ShapeDtypeStruct((B, t_out, d_model), out_dtype),
        grid_spec=pltpu.PrefetchScalarGridSpec(
            num_scalar_prefetch=0,
            grid=(B, n_tiles),
            in_specs=[
                # raw feats, time-tiled (no host-side pad / cast / reshape)
                pl.BlockSpec((None, r, d_input), lambda b, j: (b, j, 0)),
                # tiny halo block from the SAME raw array
                pl.BlockSpec((None, h_rows, d_input), halo_index_map),
                # weight / packed params resident across the whole grid
                pl.BlockSpec((w * d_input, d_model), lambda b, j: (0, 0)),
                pl.BlockSpec((3, d_model), lambda b, j: (0, 0)),
            ],
            out_specs=pl.BlockSpec((None, tt, d_model), lambda b, j: (b, j, 0)),
            scratch_shapes=[pltpu.VMEM((r + h_rows, d_input), feats.dtype)],
        ),
        compiler_params=pltpu.CompilerParams(
            dimension_semantics=("parallel", "parallel"),
            vmem_limit_bytes=int(min(64 * 1024 * 1024,
                                     max(32 * 1024 * 1024,
                                         2 * vmem_estimate(tt))))),
        cost_estimate=pl.CostEstimate(
            flops=flops,
            transcendentals=B * n_tiles * tt,
            bytes_accessed=bytes_accessed),
    )(feats, feats, w_cat, p_pack)

    # Exact integer ceil-division for output lengths.
    output_lengths = ((feat_lengths + (s - 1)) // s).astype(jnp.int32)
    return out, output_lengths


def _reference_forward(feats, feat_lengths, params, *, w_context, subsample):
    """Pure-JAX reference mirroring the PyTorch module (f32 throughout)."""
    B, T, d_input = feats.shape
    feats_pad = jnp.pad(feats, ((0, 0), (0, w_context), (0, 0)))
    x_ncw = jnp.transpose(feats_pad, (0, 2, 1))                 # (B, C_in, T_pad)
    y = jax.lax.conv_general_dilated(
        x_ncw, params["conv_w"], window_strides=(subsample,), padding="VALID",
        dimension_numbers=("NCH", "OIH", "NCH"),
        precision=jax.lax.Precision.HIGHEST)
    y = y + params["conv_b"][None, :, None]
    y = jnp.transpose(y, (0, 2, 1))                             # (B, T_conv, d_model)
    mean = jnp.mean(y, axis=-1, keepdims=True)
    var = jnp.mean((y - mean) ** 2, axis=-1, keepdims=True)
    y = (y - mean) * jax.lax.rsqrt(var + LN_EPS)
    y = y * params["ln_g"] + params["ln_b"]
    t_out = int(math.ceil(T / subsample))
    out_len = jnp.ceil(feat_lengths.astype(jnp.float32) / subsample).astype(jnp.int32)
    return y[:, :t_out, :], out_len


def _make_case(key, B, T, d_input, d_model, w_context):
    k_x, k_w, k_b, k_g, k_beta = jax.random.split(key, 5)
    feats = jax.random.normal(k_x, (B, T, d_input), dtype=jnp.float32)
    fan_in = d_input * w_context
    bound = 1.0 / math.sqrt(fan_in)
    params = {
        "conv_w": jax.random.uniform(k_w, (d_model, d_input, w_context),
                                     minval=-bound, maxval=bound, dtype=jnp.float32),
        "conv_b": jax.random.uniform(k_b, (d_model,), minval=-bound, maxval=bound,
                                     dtype=jnp.float32),
        "ln_g": 1.0 + 0.1 * jax.random.normal(k_g, (d_model,), dtype=jnp.float32),
        "ln_b": 0.1 * jax.random.normal(k_beta, (d_model,), dtype=jnp.float32),
    }
    return feats, params


if __name__ == "__main__":
    key = jax.random.PRNGKey(0)
    k1, k2, k3 = jax.random.split(key, 3)

    # --- Case 1: f32 path, single tile ---
    B, T, d_input, d_model, w_context, subsample = 2, 16, 8, 32, 3, 2
    feats, params = _make_case(k1, B, T, d_input, d_model, w_context)
    feat_lengths = jnp.array([16, 11], dtype=jnp.int32)
    outputs, output_lengths = conv1d_subsample_forward(
        feats, feat_lengths, params, w_context=w_context, subsample=subsample)
    outputs = jax.block_until_ready(outputs)
    output_lengths = jax.block_until_ready(output_lengths)
    ref_out, ref_len = _reference_forward(
        feats, feat_lengths, params, w_context=w_context, subsample=subsample)
    assert outputs.shape == (B, math.ceil(T / subsample), d_model)
    assert jnp.allclose(outputs, ref_out, atol=1e-4, rtol=1e-4)
    assert jnp.array_equal(output_lengths, ref_len)

    # --- Case 2: bf16 output writeback (halved output HBM bytes) ---
    out_bf16, _ = conv1d_subsample_forward(
        feats, feat_lengths, params, w_context=w_context, subsample=subsample,
        out_dtype=jnp.bfloat16)
    out_bf16 = jax.block_until_ready(out_bf16)
    assert jnp.allclose(out_bf16.astype(jnp.float32), ref_out, atol=5e-2, rtol=5e-2)

    # --- Case 3: uneven shapes (partial blocks, w > s halo, d_model not 128-mult) ---
    B3, T3, d_in3, d_mod3, w3, s3 = 3, 13, 5, 40, 5, 3
    feats3, params3 = _make_case(k2, B3, T3, d_in3, d_mod3, w3)
    feat_lengths3 = jnp.array([13, 7, 1], dtype=jnp.int32)
    out3, len3 = conv1d_subsample_forward(
        feats3, feat_lengths3, params3, w_context=w3, subsample=s3)
    out3 = jax.block_until_ready(out3)
    len3 = jax.block_until_ready(len3)
    ref_out3, ref_len3 = _reference_forward(
        feats3, feat_lengths3, params3, w_context=w3, subsample=s3)
    assert out3.shape == (B3, math.ceil(T3 / s3), d_mod3)
    assert jnp.allclose(out3, ref_out3, atol=1e-4, rtol=1e-4)
    assert jnp.array_equal(len3, ref_len3)

    # --- Case 4: multiple time tiles (exercises halo blocks + clamped last halo) ---
    B4, T4, d_in4, d_mod4, w4, s4 = 2, 70, 8, 32, 5, 2
    feats4, params4 = _make_case(k3, B4, T4, d_in4, d_mod4, w4)
    feat_lengths4 = jnp.array([70, 33], dtype=jnp.int32)
    out4, len4 = conv1d_subsample_forward(
        feats4, feat_lengths4, params4, w_context=w4, subsample=s4, time_tile=8)
    out4 = jax.block_until_ready(out4)
    len4 = jax.block_until_ready(len4)
    ref_out4, ref_len4 = _reference_forward(
        feats4, feat_lengths4, params4, w_context=w4, subsample=s4)
    assert out4.shape == (B4, math.ceil(T4 / s4), d_mod4)
    assert jnp.allclose(out4, ref_out4, atol=1e-4, rtol=1e-4)
    assert jnp.array_equal(len4, ref_len4)

    print("KERNEL_OK")
</pallas_src>

<mosaic_0001>
module attributes {stable_mosaic.version = 11 : i64} {
  func.func @_conv_ln_kernel(%arg0: i32, %arg1: i32, %arg2: memref<1x16x8xf32, #tpu.memory_space<vmem>>, %arg3: memref<1x8x8xf32, #tpu.memory_space<vmem>>, %arg4: memref<24x32xf32, #tpu.memory_space<vmem>>, %arg5: memref<3x32xf32, #tpu.memory_space<vmem>>, %arg6: memref<1x8x32xf32, #tpu.memory_space<vmem>>, %arg7: memref<24x8xf32, #tpu.memory_space<vmem>>) attributes {dimension_semantics = [#tpu.dimension_semantics<parallel>, #tpu.dimension_semantics<parallel>], iteration_bounds = array<i64: 2, 1>, scalar_prefetch = 0 : i64, scratch_operands = 1 : i64, tpu.core_type = #tpu.core_type<tc>, window_params = [{transform_indices = @transform_0, window_bounds = array<i64: 1, 16, 8>}, {transform_indices = @transform_1, window_bounds = array<i64: 1, 8, 8>}, {pipeline_mode = #tpu.pipeline_mode<synchronous>, transform_indices = @transform_2, window_bounds = array<i64: 24, 32>}, {pipeline_mode = #tpu.pipeline_mode<synchronous>, transform_indices = @transform_3, window_bounds = array<i64: 3, 32>}, {transform_indices = @transform_4, window_bounds = array<i64: 1, 8, 32>}]} {
    %c16_i32 = arith.constant 16 : i32
    %0 = arith.muli %arg1, %c16_i32 : i32
    %1 = tpu.iota {dimensions = array<i32: 0>} : vector<16x8xi32>
    %2 = vector.broadcast %0 : i32 to vector<16x8xi32>
    %3 = arith.addi %2, %1 : vector<16x8xi32>
    %c16_i32_0 = arith.constant 16 : i32
    %4 = vector.broadcast %c16_i32_0 : i32 to vector<16x8xi32>
    %5 = arith.cmpi slt, %3, %4 : vector<16x8xi32>
    %c0 = arith.constant 0 : index
    %c0_1 = arith.constant 0 : index
    %c0_2 = arith.constant 0 : index
    %6 = vector.load %arg2[%c0, %c0_1, %c0_2] : memref<1x16x8xf32, #tpu.memory_space<vmem>>, vector<1x16x8xf32>
    %7 = vector.shape_cast %6 : vector<1x16x8xf32> to vector<16x8xf32>
    %cst = arith.constant 0.000000e+00 : f32
    %8 = vector.broadcast %cst : f32 to vector<16x8xf32>
    %9 = arith.select %5, %7, %8 : vector<16x8xi1>, vector<16x8xf32>
    %c0_3 = arith.constant 0 : index
    %c0_4 = arith.constant 0 : index
    %10 = vector.load %arg7[%c0_3, %c0_4] : memref<24x8xf32, #tpu.memory_space<vmem>>, vector<16x8xf32>
    tpu.vector_store %arg7[%c0_3, %c0_4], %9 {strides = array<i32>} : memref<24x8xf32, #tpu.memory_space<vmem>>, vector<16x8xf32>,
    %c16_i32_5 = arith.constant 16 : i32
    %11 = arith.addi %0, %c16_i32_5 : i32
    %12 = tpu.iota {dimensions = array<i32: 0>} : vector<8x8xi32>
    %13 = vector.broadcast %11 : i32 to vector<8x8xi32>
    %14 = arith.addi %13, %12 : vector<8x8xi32>
    %c16_i32_6 = arith.constant 16 : i32
    %15 = vector.broadcast %c16_i32_6 : i32 to vector<8x8xi32>
    %16 = arith.cmpi slt, %14, %15 : vector<8x8xi32>
    %c0_7 = arith.constant 0 : index
    %c0_8 = arith.constant 0 : index
    %c0_9 = arith.constant 0 : index
    %17 = vector.load %arg3[%c0_7, %c0_8, %c0_9] : memref<1x8x8xf32, #tpu.memory_space<vmem>>, vector<1x8x8xf32>
    %18 = vector.shape_cast %17 : vector<1x8x8xf32> to vector<8x8xf32>
    %cst_10 = arith.constant 0.000000e+00 : f32
    %19 = vector.broadcast %cst_10 : f32 to vector<8x8xf32>
    %20 = arith.select %16, %18, %19 : vector<8x8xi1>, vector<8x8xf32>
    %c16 = arith.constant 16 : index
    %c0_11 = arith.constant 0 : index
    %21 = vector.load %arg7[%c16, %c0_11] : memref<24x8xf32, #tpu.memory_space<vmem>>, vector<8x8xf32>
    tpu.vector_store %arg7[%c16, %c0_11], %20 {strides = array<i32>} : memref<24x8xf32, #tpu.memory_space<vmem>>, vector<8x8xf32>,
    %c0_12 = arith.constant 0 : index
    %c0_13 = arith.constant 0 : index
    %22 = tpu.strided_load %arg7[%c0_12, %c0_13] {strides = array<i32: 2, 1>} : memref<24x8xf32, #tpu.memory_space<vmem>>, vector<8x8xf32>
    %c1 = arith.constant 1 : index
    %c0_14 = arith.constant 0 : index
    %23 = tpu.strided_load %arg7[%c1, %c0_14] {strides = array<i32: 2, 1>} : memref<24x8xf32, #tpu.memory_space<vmem>>, vector<8x8xf32>
    %c2 = arith.constant 2 : index
    %c0_15 = arith.constant 0 : index
    %24 = tpu.strided_load %arg7[%c2, %c0_15] {strides = array<i32: 2, 1>} : memref<24x8xf32, #tpu.memory_space<vmem>>, vector<8x8xf32>
    %25 = tpu.concatenate %22, %23, %24 in 1 : vector<8x8xf32>, vector<8x8xf32>, vector<8x8xf32> -> vector<8x24xf32>
    %c0_16 = arith.constant 0 : index
    %c0_17 = arith.constant 0 : index
    %26 = vector.load %arg4[%c0_16, %c0_17] : memref<24x32xf32, #tpu.memory_space<vmem>>, vector<24x32xf32>
    %cst_18 = arith.constant dense<0.000000e+00> : vector<8x32xf32>
    %27 = tpu.matmul %25, %26, %cst_18 {dimension_numbers = #tpu.dot_dimension_numbers<[1], [0], [0], [1], [0, 0, 1, 1], [], []>, precision = #tpu.contract_precision<fp32>} : vector<8x24xf32>, vector<24x32xf32>, vector<8x32xf32> -> vector<8x32xf32>
    %c0_19 = arith.constant 0 : index
    %c0_20 = arith.constant 0 : index
    %28 = vector.load %arg5[%c0_19, %c0_20] : memref<3x32xf32, #tpu.memory_space<vmem>>, vector<1x32xf32>
    %29 = vector.broadcast %28 : vector<1x32xf32> to vector<8x32xf32>
    %30 = arith.addf %27, %29 : vector<8x32xf32>
    %cst_21 = arith.constant dense<0.000000e+00> : vector<8xf32>
    %31 = vector.multi_reduction <add>, %30, %cst_21 [1] : vector<8x32xf32> to vector<8xf32>
    %32 = vector.shape_cast %31 : vector<8xf32> to vector<8x1xf32>
    %cst_22 = arith.constant 3.125000e-02 : f32
    %33 = vector.broadcast %cst_22 : f32 to vector<8x1xf32>
    %34 = arith.mulf %32, %33 : vector<8x1xf32>
    %35 = vector.broadcast %34 : vector<8x1xf32> to vector<8x32xf32>
    %36 = arith.subf %30, %35 : vector<8x32xf32>
    %37 = arith.mulf %36, %36 : vector<8x32xf32>
    %cst_23 = arith.constant dense<0.000000e+00> : vector<8xf32>
    %38 = vector.multi_reduction <add>, %37, %cst_23 [1] : vector<8x32xf32> to vector<8xf32>
    %39 = vector.shape_cast %38 : vector<8xf32> to vector<8x1xf32>
    %cst_24 = arith.constant 3.125000e-02 : f32
    %40 = vector.broadcast %cst_24 : f32 to vector<8x1xf32>
    %41 = arith.mulf %39, %40 : vector<8x1xf32>
    %cst_25 = arith.constant 9.99999974E-6 : f32
    %42 = vector.broadcast %cst_25 : f32 to vector<8x1xf32>
    %43 = arith.addf %41, %42 : vector<8x1xf32>
    %44 = math.rsqrt %43 : vector<8x1xf32>
    %45 = vector.broadcast %44 : vector<8x1xf32> to vector<8x32xf32>
    %46 = arith.mulf %36, %45 : vector<8x32xf32>
    %c1_26 = arith.constant 1 : index
    %c0_27 = arith.constant 0 : index
    %47 = vector.load %arg5[%c1_26, %c0_27] : memref<3x32xf32, #tpu.memory_space<vmem>>, vector<1x32xf32>
    %48 = vector.broadcast %47 : vector<1x32xf32> to vector<8x32xf32>
    %49 = arith.mulf %46, %48 : vector<8x32xf32>
    %c2_28 = arith.constant 2 : index
    %c0_29 = arith.constant 0 : index
    %50 = vector.load %arg5[%c2_28, %c0_29] : memref<3x32xf32, #tpu.memory_space<vmem>>, vector<1x32xf32>
    %51 = vector.broadcast %50 : vector<1x32xf32> to vector<8x32xf32>
    %52 = arith.addf %49, %51 : vector<8x32xf32>
    %c0_30 = arith.constant 0 : index
    %c0_31 = arith.constant 0 : index
    %c0_32 = arith.constant 0 : index
    %53 = vector.load %arg6[%c0_30, %c0_31, %c0_32] : memref<1x8x32xf32, #tpu.memory_space<vmem>>, vector<1x8x32xf32>
    %54 = vector.shape_cast %53 : vector<1x8x32xf32> to vector<8x32xf32>
    %55 = vector.shape_cast %52 : vector<8x32xf32> to vector<1x8x32xf32>
    tpu.vector_store %arg6[%c0_30, %c0_31, %c0_32], %55 {strides = array<i32>} : memref<1x8x32xf32, #tpu.memory_space<vmem>>, vector<1x8x32xf32>,
    return
  }
  func.func @transform_0(%arg0: i32, %arg1: i32) -> (i32, i32, i32) {
    %c0_i32 = arith.constant 0 : i32
    %c0_i32_0 = arith.constant 0 : i32
    return %arg0, %arg1, %c0_i32 : i32, i32, i32
  }
  func.func @transform_1(%arg0: i32, %arg1: i32) -> (i32, i32, i32) {
    %c1_i32 = arith.constant 1 : i32
    %0 = arith.addi %arg1, %c1_i32 : i32
    %c2_i32 = arith.constant 2 : i32
    %1 = arith.muli %0, %c2_i32 : i32
    %c1_i32_0 = arith.constant 1 : i32
    %2 = arith.minsi %1, %c1_i32_0 : i32
    %c0_i32 = arith.constant 0 : i32
    %c0_i32_1 = arith.constant 0 : i32
    return %arg0, %2, %c0_i32 : i32, i32, i32
  }
  func.func @transform_2(%arg0: i32, %arg1: i32) -> (i32, i32) {
    %c0_i32 = arith.constant 0 : i32
    %c0_i32_0 = arith.constant 0 : i32
    %c0_i32_1 = arith.constant 0 : i32
    return %c0_i32, %c0_i32_0 : i32, i32
  }
  func.func @transform_3(%arg0: i32, %arg1: i32) -> (i32, i32) {
    %c0_i32 = arith.constant 0 : i32
    %c0_i32_0 = arith.constant 0 : i32
    %c0_i32_1 = arith.constant 0 : i32
    return %c0_i32, %c0_i32_0 : i32, i32
  }
  func.func @transform_4(%arg0: i32, %arg1: i32) -> (i32, i32, i32) {
    %c0_i32 = arith.constant 0 : i32
    %c0_i32_0 = arith.constant 0 : i32
    return %arg0, %arg1, %c0_i32 : i32, i32, i32
  }
}

</mosaic_0001>

<llo_original>
// kernel: tpu_custom_call.1
$region0: #{tpu_custom_call.1}
  #allocation0 [shape = 'u32[]', space=smem, size = 0x4, offset = 0x4, fixed_abs, tag = 'smem constant byte address 0x4 - core index']
  #allocation1 [shape = 'u32[72,128]{1,0:T(1,128)}', space=vmem, size = 0x9000, scoped, tag = 'internal scratch']
  #allocation2 [shape = 'f32[24,8]{1,0:T(8,128)}', space=vmem, size = 0x3000, scoped, tag = 'scratch operand']
  %s0 = inlined_call_operand.vmem [shape: f32[2,16,8], index: 0, kind: input, shape index: {}]
  %s1 = inlined_call_operand.vmem [shape: f32[2,16,8], index: 1, kind: input, shape index: {}]
  %s2 = inlined_call_operand.vmem [shape: f32[24,32], index: 2, kind: input, shape index: {}]
  %s3 = inlined_call_operand.vmem [shape: f32[3,32], index: 3, kind: input, shape index: {}]
  %s4 = inlined_call_operand.hbm [shape: f32[2,8,32], index: 4, kind: output, shape index: {}]
  %s5 = sld [smem:[#allocation0]]
  $region49: #{tpu_custom_call.1} parent=0
    _
  %s7 = ssub.s32 1, %s5
  %s8 = scalar_select 0, %s7, %s5
  $region1: #{tpu_custom_call.1} parent=0
    #allocation3 [shape = 'u8[8192]{0}', space=vmem, size = 0x2000, scoped, tag = 'output window, operand 0']
    #allocation4 [shape = 's32[2]{0}', space=sflag, size = 0x8, scoped, tag = 'scoped memory for tpu_custom_call.1']
    %9 = vsyncpa [#allocation4], 0
    %s10 = scalar_lea.sflag [#allocation4], 1
    %11 = vsyncpa %s10, 0
    loop: start=0, step=1, limit=4
    $region2: #{tpu_custom_call.1} parent=1 // loop_pre_header
      _
    $region3: #{tpu_custom_call.1} parent=1 // loop_header
      %s13 = sphi 0, %s17
      %p14 = scmp.ge.s32.totalorder %s13, 4
      %s20 = sphi 0, %s32
      %s21 = sphi 0, %s28
      %s22 = sphi 0, %s20
      %s23 = sphi 0, %s21
      %s24 = sphi 0, %s22
      %s25 = sphi 0, %s23
      %s37 = sphi 0, %s39
      %s40 = sphi 0, %s37
      %s41 = sphi 0, %s40
      %s57 = sphi 0, %s41
      %s73 = sphi 0, %s75
      %s76 = sphi 0, %s73
      %s77 = sphi 0, %s76
      %s93 = sphi 0, %s77
      %s97 = sphi 0, %s97
      %s99 = sphi 0, %s97
      %s100 = sphi 0, %s99
      %s114 = sphi 0, %s100
      %s118 = sphi 0, %s118
      %s120 = sphi 0, %s118
      %s121 = sphi 0, %s120
      %s135 = sphi 0, %s121
      %s143 = sphi 0, %s145
      %s146 = sphi 0, %s143
      %s147 = sphi 0, %s146
      %s163 = sphi 0, %s147
    $region4: #{tpu_custom_call.1} parent=1 // loop_header_branch
      %16 = sbr.rel (%p14) target = $region8
    $region5: #{tpu_custom_call.1} parent=1 // loop_body
      %s18 = ssub.s32 %s13, 1
      %s19 = ssub.s32 %s13, 2
      %s26 = sadd.s32 1, %s21
      %p27 = scmp.ge.s32.totalorder %s26, 1
      %s28 = scalar_select %p27, 0, %s26
      %s29 = sadd.s32 1, %s20
      %s30 = scalar_select %p27, %s29, %s20
      %p31 = scmp.ge.s32.totalorder %s30, 2
      %s32 = scalar_select %p31, 0, %s30
      %s33 = ssub.s32 %s20, %s32
      %s34 = ssub.s32 %s21, %s28
      %s35 = sor.u32 %s33, %s34
      %p36 = scmp.eq.s32.totalorder %s35, 0
      %s38 = sadd.s32 %s37, 1
      %s39 = scalar_select %p36, %s37, %s38
      %p42 = pneg %p36
      %p43 = scmp.eq.s32.totalorder %s13, 1
      %p44 = por %p42, %p43
      %p45 = scmp.ne.s32.totalorder %s37, %s40
      %p46 = scmp.eq.s32.totalorder %s13, 0
      %p47 = por %p45, %p46
      %p48 = scmp.ne.s32.totalorder %s37, %s40
      %p49 = scmp.eq.s32.totalorder %s18, 1
      %p50 = por %p48, %p49
      %p51 = scmp.ne.s32.totalorder %s40, %s41
      %p52 = scmp.eq.s32.totalorder %s18, 0
      %p53 = por %p51, %p52
      %p54 = scmp.ne.s32.totalorder %s40, %s41
      %p55 = scmp.eq.s32.totalorder %s19, 1
      %p56 = por %p54, %p55
      %p58 = scmp.ne.s32.totalorder %s41, %s57
      %p59 = scmp.eq.s32.totalorder %s19, 0
      %p60 = por %p58, %p59
      %s61 = sadd.s32 %s21, 1
      %s62 = smul.u32 %s61, 2
      %p63 = scmp.lt.s32.totalorder %s62, 1
      %s64 = scalar_select %p63, %s62, 1
      %s65 = sadd.s32 %s28, 1
      %s66 = smul.u32 %s65, 2
      %p67 = scmp.lt.s32.totalorder %s66, 1
      %s68 = scalar_select %p67, %s66, 1
      %s69 = ssub.s32 %s20, %s32
      %s70 = ssub.s32 %s64, %s68
      %s71 = sor.u32 %s69, %s70
      %p72 = scmp.eq.s32.totalorder %s71, 0
      %s74 = sadd.s32 %s73, 1
      %s75 = scalar_select %p72, %s73, %s74
      %p78 = pneg %p72
      %p79 = scmp.eq.s32.totalorder %s13, 1
      %p80 = por %p78, %p79
      %p81 = scmp.ne.s32.totalorder %s73, %s76
      %p82 = scmp.eq.s32.totalorder %s13, 0
      %p83 = por %p81, %p82
      %p84 = scmp.ne.s32.totalorder %s73, %s76
      %p85 = scmp.eq.s32.totalorder %s18, 1
      %p86 = por %p84, %p85
      %p87 = scmp.ne.s32.totalorder %s76, %s77
      %p88 = scmp.eq.s32.totalorder %s18, 0
      %p89 = por %p87, %p88
      %p90 = scmp.ne.s32.totalorder %s76, %s77
      %p91 = scmp.eq.s32.totalorder %s19, 1
      %p92 = por %p90, %p91
      %p94 = scmp.ne.s32.totalorder %s77, %s93
      %p95 = scmp.eq.s32.totalorder %s19, 0
      %p96 = por %p94, %p95
      %s98 = sadd.s32 %s97, 1
      %p101 = scmp.eq.s32.totalorder %s13, 1
      %p102 = scmp.ne.s32.totalorder %s97, %s99
      %p103 = scmp.eq.s32.totalorder %s13, 0
      %p104 = por %p102, %p103
      %p105 = scmp.ne.s32.totalorder %s97, %s99
      %p106 = scmp.eq.s32.totalorder %s18, 1
      %p107 = por %p105, %p106
      %p108 = scmp.ne.s32.totalorder %s99, %s100
      %p109 = scmp.eq.s32.totalorder %s18, 0
      %p110 = por %p108, %p109
      %p111 = scmp.ne.s32.totalorder %s99, %s100
      %p112 = scmp.eq.s32.totalorder %s19, 1
      %p113 = por %p111, %p112
      %p115 = scmp.ne.s32.totalorder %s100, %s114
      %p116 = scmp.eq.s32.totalorder %s19, 0
      %p117 = por %p115, %p116
      %s119 = sadd.s32 %s118, 1
      %p122 = scmp.eq.s32.totalorder %s13, 1
      %p123 = scmp.ne.s32.totalorder %s118, %s120
      %p124 = scmp.eq.s32.totalorder %s13, 0
      %p125 = por %p123, %p124
      %p126 = scmp.ne.s32.totalorder %s118, %s120
      %p127 = scmp.eq.s32.totalorder %s18, 1
      %p128 = por %p126, %p127
      %p129 = scmp.ne.s32.totalorder %s120, %s121
      %p130 = scmp.eq.s32.totalorder %s18, 0
      %p131 = por %p129, %p130
      %p132 = scmp.ne.s32.totalorder %s120, %s121
      %p133 = scmp.eq.s32.totalorder %s19, 1
      %p134 = por %p132, %p133
      %p136 = scmp.ne.s32.totalorder %s121, %s135
      %p137 = scmp.eq.s32.totalorder %s19, 0
      %p138 = por %p136, %p137
      %s139 = ssub.s32 %s20, %s32
      %s140 = ssub.s32 %s21, %s28
      %s141 = sor.u32 %s139, %s140
      %p142 = scmp.eq.s32.totalorder %s141, 0
      %s144 = sadd.s32 %s143, 1
      %s145 = scalar_select %p142, %s143, %s144
      %p148 = pneg %p142
      %p149 = scmp.eq.s32.totalorder %s13, 1
      %p150 = por %p148, %p149
      %p151 = scmp.ne.s32.totalorder %s143, %s146
      %p152 = scmp.eq.s32.totalorder %s13, 0
      %p153 = por %p151, %p152
      %p154 = scmp.ne.s32.totalorder %s143, %s146
      %p155 = scmp.eq.s32.totalorder %s18, 1
      %p156 = por %p154, %p155
      %p157 = scmp.ne.s32.totalorder %s146, %s147
      %p158 = scmp.eq.s32.totalorder %s18, 0
      %p159 = por %p157, %p158
      %p160 = scmp.ne.s32.totalorder %s146, %s147
      %p161 = scmp.eq.s32.totalorder %s19, 1
      %p162 = por %p160, %p161
      %p164 = scmp.ne.s32.totalorder %s147, %s163
      %p165 = scmp.eq.s32.totalorder %s19, 0
      %p166 = por %p164, %p165
      %p167 = scmp.le.s32.totalorder 1, %s13
      %p168 = scmp.lt.s32.totalorder %s13, 3
      %p169 = pnand %p167, %p168
      %p170 = pneg %p169
      // Predicated region
      $region9: #{tpu_custom_call.1} parent=5 // pred_check
        _
      $region10: #{tpu_custom_call.1} parent=5 // pred_check_branch
        %172 = sbr.rel (%p169) target = $region12
      $region11: #{tpu_custom_call.1} parent=5 // pred_region
        %s173 = ssub.s32 %s13, 1
        // Predicated region
        $region13: #{tpu_custom_call.1} parent=11 // pred_check
          %p174 = pneg %p110
        $region14: #{tpu_custom_call.1} parent=11 // pred_check_branch
          %176 = sbr.rel (%p174) target = $region16
        $region15: #{tpu_custom_call.1} parent=11 // pred_region
          _
        $region16: #{tpu_custom_call.1} parent=11 // pred_fallthru
          _
        // Predicated region
        $region17: #{tpu_custom_call.1} parent=11 // pred_check
          %p177 = pneg %p131
        $region18: #{tpu_custom_call.1} parent=11 // pred_check_branch
          %179 = sbr.rel (%p177) target = $region20
        $region19: #{tpu_custom_call.1} parent=11 // pred_region
          _
        $region20: #{tpu_custom_call.1} parent=11 // pred_fallthru
          _
      $region12: #{tpu_custom_call.1} parent=5 // pred_fallthru
        _
      %p180 = scmp.lt.s32.totalorder %s13, 2
      // Predicated region
      $region21: #{tpu_custom_call.1} parent=5 // pred_check
        %p181 = pneg %p180
      $region22: #{tpu_custom_call.1} parent=5 // pred_check_branch
        %183 = sbr.rel (%p181) target = $region24
      $region23: #{tpu_custom_call.1} parent=5 // pred_region
        // Predicated region
        $region25: #{tpu_custom_call.1} parent=23 // pred_check
          %p184 = pneg %p47
        $region26: #{tpu_custom_call.1} parent=23 // pred_check_branch
          %186 = sbr.rel (%p184) target = $region28
        $region27: #{tpu_custom_call.1} parent=23 // pred_region
          %s187 = smul.u32 2, %s21
          %p188 = scmp.lt.s32.totalorder %s20, 1
          %s189 = scalar_select %p188, %s20, 1
          %p190 = scmp.lt.s32.totalorder %s187, 1
          %s191 = scalar_select %p190, %s187, 1
          %s192 = smul.addr %s189, 2
          %s193 = sadd.s32 %s191, %s192
          %s194 = smul.addr %s193, 8
          %s195 = scalar_lea.vmem %s0, %s194
          %s196 = smul.u32 2, %s21
        $region28: #{tpu_custom_call.1} parent=23 // pred_fallthru
          _
        // Predicated region
        $region29: #{tpu_custom_call.1} parent=23 // pred_check
          %p197 = pneg %p83
        $region30: #{tpu_custom_call.1} parent=23 // pred_check_branch
          %199 = sbr.rel (%p197) target = $region32
        $region31: #{tpu_custom_call.1} parent=23 // pred_region
          %s200 = sadd.s32 %s21, 1
          %s201 = smul.u32 %s200, 2
          %p202 = scmp.lt.s32.totalorder %s201, 1
          %s203 = scalar_select %p202, %s201, 1
          %p204 = scmp.lt.s32.totalorder %s20, 1
          %s205 = scalar_select %p204, %s20, 1
          %p206 = scmp.lt.s32.totalorder %s203, 1
          %s207 = scalar_select %p206, %s203, 1
          %s208 = smul.addr %s205, 2
          %s209 = sadd.s32 %s207, %s208
          %s210 = smul.addr %s209, 8
          %s211 = scalar_lea.vmem %s1, %s210
          %s212 = sadd.s32 %s21, 1
          %s213 = smul.u32 %s212, 2
          %p214 = scmp.lt.s32.totalorder %s213, 1
          %s215 = scalar_select %p214, %s213, 1
        $region32: #{tpu_custom_call.1} parent=23 // pred_fallthru
          _
      $region24: #{tpu_custom_call.1} parent=5 // pred_fallthru
        _
      %p216 = scmp.le.s32.totalorder 1, %s13
      %p217 = scmp.lt.s32.totalorder %s13, 3
      %p218 = pnand %p216, %p217
      %p219 = pneg %p218
      // Predicated region
      $region33: #{tpu_custom_call.1} parent=5 // pred_check
        _
      $region34: #{tpu_custom_call.1} parent=5 // pred_check_branch
        %221 = sbr.rel (%p218) target = $region36
      $region35: #{tpu_custom_call.1} parent=5 // pred_region
        %s222 = ssub.s32 %s13, 1
        %s223 = smul.u32 2, %s23
        %p224 = scmp.lt.s32.totalorder %s22, 1
        %s225 = scalar_select %p224, %s22, 1
        %p226 = scmp.lt.s32.totalorder %s223, 1
        %s227 = scalar_select %p226, %s223, 1
        %s228 = smul.addr %s225, 2
        %s229 = sadd.s32 %s227, %s228
        %s230 = smul.addr %s229, 8
        %s231 = scalar_lea.vmem %s0, %s230
        %p232 = pneg %p53
        %p233 = pneg %p50
        %s234 = sadd.s32 %s23, 1
        %s235 = smul.u32 %s234, 2
        %p236 = scmp.lt.s32.totalorder %s235, 1
        %s237 = scalar_select %p236, %s235, 1
        %p238 = scmp.lt.s32.totalorder %s22, 1
        %s239 = scalar_select %p238, %s22, 1
        %p240 = scmp.lt.s32.totalorder %s237, 1
        %s241 = scalar_select %p240, %s237, 1
        %s242 = smul.addr %s239, 2
        %s243 = sadd.s32 %s241, %s242
        %s244 = smul.addr %s243, 8
        %s245 = scalar_lea.vmem %s1, %s244
        %p246 = pneg %p89
        %p247 = pneg %p86
        %p248 = pneg %p110
        %p249 = pneg %p107
        %p250 = pneg %p131
        %p251 = pneg %p128
        %p252 = pneg %p159
        %p253 = pneg %p156
        %s254 = sand.u32 %s146, 1
        %s255 = scalar_lea.sflag [#allocation4], %s254
        %s256 = sand.u32 %s146, 1
        %s257 = smul.addr %s256, 8
        %s258 = scalar_lea.vmem [#allocation3], %s257
        %s259 = smul.u32 2, %s23
        %p260 = scmp.lt.s32.totalorder %s22, 1
        %s261 = scalar_select %p260, %s22, 1
        %p262 = scmp.lt.s32.totalorder %s259, 1
        %s263 = scalar_select %p262, %s259, 1
        %s264 = smul.addr %s261, 2
        %s265 = sadd.s32 %s263, %s264
        %s266 = smul.addr %s265, 8
        %s267 = scalar_lea.vmem %s0, %s266
        %s268 = smul.u32 2, %s23
        %s269 = sadd.s32 %s23, 1
        %s270 = smul.u32 %s269, 2
        %p271 = scmp.lt.s32.totalorder %s270, 1
        %s272 = scalar_select %p271, %s270, 1
        %p273 = scmp.lt.s32.totalorder %s22, 1
        %s274 = scalar_select %p273, %s22, 1
        %p275 = scmp.lt.s32.totalorder %s272, 1
        %s276 = scalar_select %p275, %s272, 1
        %s277 = smul.addr %s274, 2
        %s278 = sadd.s32 %s276, %s277
        %s279 = smul.addr %s278, 8
        %s280 = scalar_lea.vmem %s1, %s279
        %s281 = sadd.s32 %s23, 1
        %s282 = smul.u32 %s281, 2
        %p283 = scmp.lt.s32.totalorder %s282, 1
        %s284 = scalar_select %p283, %s282, 1
        %s285 = smul.u32 %s23, 16
        %v286 = vlaneseq
        %v287 = vshrl.u32 %v286, 7
        %v288 = vadd.s32 %v287, 8
        %v289 = vstv %s285
        %v290 = vadd.s32 %v289, %v287
        %v291 = vadd.s32 %v289, %v288
        %vm292 = vcmp.lt.s32.totalorder %v290, 16
        %vm293 = vcmp.lt.s32.totalorder %v291, 16
        %v294 = vld [vmem:[%s267] sm:$0xff]
        %v295 = vld [vmem:[%s267 + $0x8] sm:$0xff]
        %v296 = vsel %vm292, %v294, 0.0
        %v297 = vsel %vm293, %v295, 0.0
        %vm298 = vcmask 64512
        %299 = vst.msk [vmem:[#allocation2] sm:$0xff] %vm298, %v296
        %300 = vst.msk [vmem:[#allocation2 + $0x8] sm:$0xff] %vm298, %v297
        %s301 = sadd.s32 %s285, 16
        %v302 = vstv %s301
        %v303 = vadd.s32 %v302, %v287
        %vm304 = vcmp.lt.s32.totalorder %v303, 16
        %v305 = vld [vmem:[%s280] sm:$0xff]
        %v306 = vsel %vm304, %v305, 0.0
        %307 = vst.msk [vmem:[#allocation2 + $0x10] sm:$0xff] %vm298, %v306
        %v308 = vld [vmem:[#allocation2] ss:$2 sm:$0xff]
        %s309 = scalar_lea.vmem [#allocation2], 1
        %v310 = vld [vmem:[%s309] ss:$2 sm:$0xff]
        %s311 = scalar_lea.vmem [#allocation2], 2
        %v312 = vld [vmem:[%s311] ss:$2 sm:$0xff]
        %314 = vrot.lane.b32.xlu0 %v310, 8
        %v315 = vpop.permute.xlu0 %314
        %318 = vrot.lane.b32.xlu0 %v312, 16
        %v319 = vpop.permute.xlu0 %318
        %v321 = vsel %vm298, %v308, %v315
        %vm322 = vcmask 130048
        %v323 = vsel %vm322, %v321, %v319
        %v324 = vld [vmem:[%s2] sm:$0xff]
        %v325 = vld [vmem:[%s2 + $0x8] sm:$0xff]
        %v326 = vld [vmem:[%s2 + $0x10] sm:$0xff]
        %v327 = vld [vmem:[%s3] sm:$0x1]
        %v328 = vperm.slane %v327, 0
        %vm329 = vcmask 195584
        %v331 = vsel %vm329, %v323, 0
        %333 = vmatpush.msra.mxu0 0.0
        %334 = vmatpush.msra.mxu0 0.0
        %335 = vmatpush.msra.mxu0 0.0
        %336 = vmatpush.msra.mxu0 0.0
        %337 = vmatpush.msra.mxu0 0.0
        %338 = vmatpush.msra.mxu0 0.0
        %339 = vmatpush.msra.mxu0 0.0
        %340 = vmatpush.msra.mxu0 0.0
        %341 = vmatpush.msra.mxu0 0.0
        %342 = vmatpush.msra.mxu0 0.0
        %343 = vmatpush.msra.mxu0 0.0
        %344 = vmatpush.msra.mxu0 0.0
        %345 = vmatpush.msra.mxu0 0.0
        %v346 = vand.u32 %v326, 4294901760
        %347 = vmatpush.msra.mxu0 %v346
        %v348 = vand.u32 %v325, 4294901760
        %349 = vmatpush.msra.mxu0 %v348
        %v350 = vand.u32 %v324, 4294901760
        %351 = vmatpush.msra.mxu0 %v350
        %v352 = vand.u32 %v331, 4294901760
        %v353 = vsub.f32 %v331, %v352
        %v354 = vand.u32 %v353, 4294901760
        %v355 = vsub.f32 %v353, %v354
        %v356 = vand.u32 %v355, 4294901760
        %357 = vmatmul.f32.gmra.mxu0 %v356
        %v358 = vpop.f32.mrf.mxu0
        %v359 = vadd.f32 %v328, %v358
        %360 = vdwg.mxu0
        %361 = vmatpush.msra.mxu0 0.0
        %362 = vmatpush.msra.mxu0 0.0
        %363 = vmatpush.msra.mxu0 0.0
        %364 = vmatpush.msra.mxu0 0.0
        %365 = vmatpush.msra.mxu0 0.0
        %366 = vmatpush.msra.mxu0 0.0
        %367 = vmatpush.msra.mxu0 0.0
        %368 = vmatpush.msra.mxu0 0.0
        %369 = vmatpush.msra.mxu0 0.0
        %370 = vmatpush.msra.mxu0 0.0
        %371 = vmatpush.msra.mxu0 0.0
        %372 = vmatpush.msra.mxu0 0.0
        %373 = vmatpush.msra.mxu0 0.0
        %v374 = vand.u32 %v326, 4294901760
        %v375 = vsub.f32 %v326, %v374
        %v376 = vand.u32 %v375, 4294901760
        %v377 = vsub.f32 %v375, %v376
        %v378 = vand.u32 %v377, 4294901760
        %379 = vmatpush.msra.mxu0 %v378
        %v380 = vand.u32 %v325, 4294901760
        %v381 = vsub.f32 %v325, %v380
        %v382 = vand.u32 %v381, 4294901760
        %v383 = vsub.f32 %v381, %v382
        %v384 = vand.u32 %v383, 4294901760
        %385 = vmatpush.msra.mxu0 %v384
        %v386 = vand.u32 %v324, 4294901760
        %v387 = vsub.f32 %v324, %v386
        %v388 = vand.u32 %v387, 4294901760
        %v389 = vsub.f32 %v387, %v388
        %v390 = vand.u32 %v389, 4294901760
        %391 = vmatpush.msra.mxu0 %v390
        %v392 = vand.u32 %v331, 4294901760
        %393 = vmatmul.f32.gmra.mxu0 %v392
        %v394 = vpop.f32.mrf.mxu0
        %v395 = vadd.f32 %v359, %v394
        %396 = vdwg.mxu0
        %397 = vmatpush.msra.mxu0 0.0
        %398 = vmatpush.msra.mxu0 0.0
        %399 = vmatpush.msra.mxu0 0.0
        %400 = vmatpush.msra.mxu0 0.0
        %401 = vmatpush.msra.mxu0 0.0
        %402 = vmatpush.msra.mxu0 0.0
        %403 = vmatpush.msra.mxu0 0.0
        %404 = vmatpush.msra.mxu0 0.0
        %405 = vmatpush.msra.mxu0 0.0
        %406 = vmatpush.msra.mxu0 0.0
        %407 = vmatpush.msra.mxu0 0.0
        %408 = vmatpush.msra.mxu0 0.0
        %409 = vmatpush.msra.mxu0 0.0
        %v410 = vand.u32 %v326, 4294901760
        %v411 = vsub.f32 %v326, %v410
        %412 = vmatpush.msra.mxu0 %v411
        %v413 = vand.u32 %v325, 4294901760
        %v414 = vsub.f32 %v325, %v413
        %415 = vmatpush.msra.mxu0 %v414
        %v416 = vand.u32 %v324, 4294901760
        %v417 = vsub.f32 %v324, %v416
        %418 = vmatpush.msra.mxu0 %v417
        %v419 = vand.u32 %v331, 4294901760
        %v420 = vsub.f32 %v331, %v419
        %421 = vmatmul.f32.gmra.mxu0 %v420
        %v422 = vpop.f32.mrf.mxu0
        %v423 = vadd.f32 %v395, %v422
        %424 = vdwg.mxu0
        %425 = vmatpush.msra.mxu0 0.0
        %426 = vmatpush.msra.mxu0 0.0
        %427 = vmatpush.msra.mxu0 0.0
        %428 = vmatpush.msra.mxu0 0.0
        %429 = vmatpush.msra.mxu0 0.0
        %430 = vmatpush.msra.mxu0 0.0
        %431 = vmatpush.msra.mxu0 0.0
        %432 = vmatpush.msra.mxu0 0.0
        %433 = vmatpush.msra.mxu0 0.0
        %434 = vmatpush.msra.mxu0 0.0
        %435 = vmatpush.msra.mxu0 0.0
        %436 = vmatpush.msra.mxu0 0.0
        %437 = vmatpush.msra.mxu0 0.0
        %v438 = vand.u32 %v326, 4294901760
        %439 = vmatpush.msra.mxu0 %v438
        %v440 = vand.u32 %v325, 4294901760
        %441 = vmatpush.msra.mxu0 %v440
        %v442 = vand.u32 %v324, 4294901760
        %443 = vmatpush.msra.mxu0 %v442
        %v444 = vand.u32 %v331, 4294901760
        %v445 = vsub.f32 %v331, %v444
        %v446 = vand.u32 %v445, 4294901760
        %447 = vmatmul.f32.gmra.mxu0 %v446
        %v448 = vpop.f32.mrf.mxu0
        %v449 = vadd.f32 %v423, %v448
        %450 = vdwg.mxu0
        %451 = vmatpush.msra.mxu0 0.0
        %452 = vmatpush.msra.mxu0 0.0
        %453 = vmatpush.msra.mxu0 0.0
        %454 = vmatpush.msra.mxu0 0.0
        %455 = vmatpush.msra.mxu0 0.0
        %456 = vmatpush.msra.mxu0 0.0
        %457 = vmatpush.msra.mxu0 0.0
        %458 = vmatpush.msra.mxu0 0.0
        %459 = vmatpush.msra.mxu0 0.0
        %460 = vmatpush.msra.mxu0 0.0
        %461 = vmatpush.msra.mxu0 0.0
        %462 = vmatpush.msra.mxu0 0.0
        %463 = vmatpush.msra.mxu0 0.0
        %v464 = vand.u32 %v326, 4294901760
        %v465 = vsub.f32 %v326, %v464
        %v466 = vand.u32 %v465, 4294901760
        %467 = vmatpush.msra.mxu0 %v466
        %v468 = vand.u32 %v325, 4294901760
        %v469 = vsub.f32 %v325, %v468
        %v470 = vand.u32 %v469, 4294901760
        %471 = vmatpush.msra.mxu0 %v470
        %v472 = vand.u32 %v324, 4294901760
        %v473 = vsub.f32 %v324, %v472
        %v474 = vand.u32 %v473, 4294901760
        %475 = vmatpush.msra.mxu0 %v474
        %v476 = vand.u32 %v331, 4294901760
        %477 = vmatmul.f32.gmra.mxu0 %v476
        %v478 = vpop.f32.mrf.mxu0
        %v479 = vadd.f32 %v449, %v478
        %480 = vdwg.mxu0
        %481 = vmatpush.msra.mxu0 0.0
        %482 = vmatpush.msra.mxu0 0.0
        %483 = vmatpush.msra.mxu0 0.0
        %484 = vmatpush.msra.mxu0 0.0
        %485 = vmatpush.msra.mxu0 0.0
        %486 = vmatpush.msra.mxu0 0.0
        %487 = vmatpush.msra.mxu0 0.0
        %488 = vmatpush.msra.mxu0 0.0
        %489 = vmatpush.msra.mxu0 0.0
        %490 = vmatpush.msra.mxu0 0.0
        %491 = vmatpush.msra.mxu0 0.0
        %492 = vmatpush.msra.mxu0 0.0
        %493 = vmatpush.msra.mxu0 0.0
        %v494 = vand.u32 %v326, 4294901760
        %495 = vmatpush.msra.mxu0 %v494
        %v496 = vand.u32 %v325, 4294901760
        %497 = vmatpush.msra.mxu0 %v496
        %v498 = vand.u32 %v324, 4294901760
        %499 = vmatpush.msra.mxu0 %v498
        %v500 = vand.u32 %v331, 4294901760
        %501 = vmatmul.f32.gmra.mxu0 %v500
        %v502 = vpop.f32.mrf.mxu0
        %v503 = vadd.f32 %v479, %v502
        %504 = vdwg.mxu0
        %vm505 = vcmask 261120
        %v506 = vsel %vm505, %v503, 0.0
        %507 = vadd.xlane.f32.xlu0 %v506
        %v508 = vpop.xlane.xlu0 %507
        %v509 = vmul.f32 %v508, 0.03125
        %v510 = vsub.f32 %v503, %v509
        %v511 = vmul.f32 %v510, %v510
        %v512 = vsel %vm505, %v511, 0.0
        %513 = vadd.xlane.f32.xlu0 %v512
        %v514 = vpop.xlane.xlu0 %513
        %v515 = vmul.f32 %v514, 0.03125
        %v516 = vadd.f32 %v515, 1e-05
        %v517 = vrsqrt.pop %v516
        %v518 = vmul.f32 %v517, %v516
        %v519 = vmul.f32 %v518, %v517
        %v520 = vmul.f32 0.5, %v519
        %v521 = vsub.f32 1.5, %v520
        %v522 = vmul.f32 %v517, %v521
        %vm523 = vweird.f32 %v516
        %vm524 = vweird.f32 %v517
        %vm525 = vmor %vm523, %vm524
        %v526 = vsel %vm525, %v517, %v522
        %v527 = vmul.f32 %v510, %v526
        %v528 = vld [vmem:[%s3 + $0x1] sm:$0x1]
        %v529 = vperm.slane %v528, 0
        %v530 = vmul.f32 %v527, %v529
        %v531 = vld [vmem:[%s3 + $0x2] sm:$0x1]
        %v532 = vperm.slane %v531, 0
        %v533 = vadd.f32 %v530, %v532
        %534 = vst.msk [vmem:[%s258] sm:$0xff] %vm505, %v533
        %s535 = sand.u32 %s146, 1
        %s536 = scalar_lea.sflag [#allocation4], %s535
        %s537 = sand.u32 %s146, 1
        %s538 = smul.addr %s537, 8
        %s539 = scalar_lea.vmem [#allocation3], %s538
        // Predicated region
        $region37: #{tpu_custom_call.1} parent=35 // pred_check
          %p540 = pneg %p156
        $region38: #{tpu_custom_call.1} parent=35 // pred_check_branch
          %542 = sbr.rel (%p540) target = $region40
        $region39: #{tpu_custom_call.1} parent=35 // pred_region
          %544 = vsyncadd %s536, 0
          %s545 = sadd.s32 %s23, %s22
          %s546 = smul.addr %s545, 8
          %s547 = scalar_lea.hbm %s4, %s546
          %s549 = sshll.u32 %s539, 4
          %s550 = int_to_ptr.vmem [resolvable:$true] %s549
          %s551 = sshll.u32 %s547, 4
          %s552 = int_to_ptr.hbm [resolvable:$true] %s551
          %554 = dma.vmem_to_hbm [thread:$0]  %s550, 128, %s552, %s536
        $region40: #{tpu_custom_call.1} parent=35 // pred_fallthru
          _
      $region36: #{tpu_custom_call.1} parent=5 // pred_fallthru
        _
      %p555 = scmp.le.s32.totalorder 2, %s13
      // Predicated region
      $region41: #{tpu_custom_call.1} parent=5 // pred_check
        %p556 = pneg %p555
      $region42: #{tpu_custom_call.1} parent=5 // pred_check_branch
        %558 = sbr.rel (%p556) target = $region44
      $region43: #{tpu_custom_call.1} parent=5 // pred_region
        %s559 = ssub.s32 %s13, 2
        // Predicated region
        $region45: #{tpu_custom_call.1} parent=43 // pred_check
          %p560 = pneg %p162
        $region46: #{tpu_custom_call.1} parent=43 // pred_check_branch
          %562 = sbr.rel (%p560) target = $region48
        $region47: #{tpu_custom_call.1} parent=43 // pred_region
          %s563 = sand.u32 %s147, 1
          %s564 = scalar_lea.sflag [#allocation4], %s563
          %s565 = sand.u32 %s147, 1
          %s566 = smul.addr %s565, 8
          %s567 = scalar_lea.vmem [#allocation3], %s566
          %569 = dma.done %s564, 128
        $region48: #{tpu_custom_call.1} parent=43 // pred_fallthru
          _
      $region44: #{tpu_custom_call.1} parent=5 // pred_fallthru
        _
    $region6: #{tpu_custom_call.1} parent=1 // loop_footer
      %s17 = sadd.s32 1, %s13
    $region7: #{tpu_custom_call.1} parent=1 // loop_footer_branch
      %12 = sbr.rel target = $region3
    $region8: #{tpu_custom_call.1} parent=1 // loop_exit
      _
    %570 = vsyncpa [#allocation4], 1
    %s571 = scalar_lea.sflag [#allocation4], 1
    %572 = vsyncpa %s571, 1

</llo_original>
